<compile_context>
chip_gen: v7x
topology: tpu7x:2x2x1
jax: 0.10.0
libtpu: 0.0.40
codegen_flags: <defaults>
</compile_context>

<pallas_src>
import jax
import jax.numpy as jnp
from jax.experimental import pallas as pl
from jax.experimental.pallas import tpu as pltpu


def _round_up(x, m):
    return ((x + m - 1) // m) * m


# --------------------------------------------------------------------------
# Kernel 1: batched, gate-fused input projection  gx = x @ W_ih^T + b_ih
# --------------------------------------------------------------------------
def _input_proj_kernel(x_ref, w_ref, b_ref, o_ref):
    """One row tile: (tm, insize) @ (insize, 3*size) + bias, f32 accumulate."""
    acc = jnp.dot(x_ref[...], w_ref[...], preferred_element_type=jnp.float32)
    o_ref[...] = (acc + b_ref[...]).astype(o_ref.dtype)


# --------------------------------------------------------------------------
# Kernel 2: sequential GRU recurrence over time (grid axis = T, "arbitrary")
# --------------------------------------------------------------------------
def _gru_recurrence_kernel(gx_ref, whh_ref, bhh_ref, y_ref, h_ref):
    """One timestep.  h_ref (VMEM scratch) carries the hidden state across
    grid iterations; W_hh^T / b_hh are resident (constant index maps)."""
    t = pl.program_id(0)

    @pl.when(t == 0)
    def _():
        h_ref[...] = jnp.zeros_like(h_ref)

    h = h_ref[...]                                     # (N, size) f32
    gx = gx_ref[0]                                     # (N, 3*size) f32
    # Single fused dot for all three recurrent gates.
    gh = jnp.dot(h.astype(whh_ref.dtype), whh_ref[...],
                 preferred_element_type=jnp.float32) + bhh_ref[...]

    size = h.shape[-1]
    gx_r, gx_z, gx_n = gx[:, :size], gx[:, size:2 * size], gx[:, 2 * size:]
    gh_r, gh_z, gh_n = gh[:, :size], gh[:, size:2 * size], gh[:, 2 * size:]

    r = jax.nn.sigmoid(gx_r + gh_r)
    z = jax.nn.sigmoid(gx_z + gh_z)
    n = jnp.tanh(gx_n + r * gh_n)                      # linear_before_reset
    h_new = (1.0 - z) * n + z * h

    h_ref[...] = h_new
    y_ref[0] = h_new.astype(y_ref.dtype)


def _vmem_limit_bytes(tm, insize, size, compute_dtype):
    it = jnp.dtype(compute_dtype).itemsize
    x_tile = tm * insize * it
    out_tile = tm * 3 * size * 4
    weights = insize * 3 * size * it + 3 * size * 4
    need = 2 * (x_tile + out_tile) + 2 * weights + (4 << 20)
    # 32 MiB floor (scoped default on v6e/v7x), 64 MiB cap (fits all gens).
    return int(min(max(need, 32 << 20), 64 << 20))


def cudnn_gru_forward(x, w_ih, w_hh, b_ih, b_hh, *, tile_m=512,
                      compute_dtype=None):
    """Forward pass of CudnnGru.

    Args:
      x:    (T, N, insize) float32.
      w_ih: (3*size, insize)  -- PyTorch weight_ih_l0, gate order [r, z, n].
      w_hh: (3*size, size)    -- PyTorch weight_hh_l0.
      b_ih: (3*size,)
      b_hh: (3*size,)
      tile_m: row-tile target for the input projection (clamped / padded).
      compute_dtype: MXU input dtype (e.g. jnp.bfloat16); accumulation, gates
        and hidden state remain f32.  Defaults to x.dtype.

    Returns:
      y: (T, N, size) float32 -- hidden state at every timestep.
    """
    T, N, insize = x.shape
    three_size, size = w_hh.shape
    assert three_size == 3 * size

    compute_dtype = x.dtype if compute_dtype is None else compute_dtype

    # Gate-fused, transposed weights: a single dot computes all three gates.
    w_ih_t = jnp.transpose(w_ih).astype(compute_dtype)      # (insize, 3*size)
    w_hh_t = jnp.transpose(w_hh).astype(compute_dtype)      # (size,   3*size)
    b_ih_2d = b_ih.reshape(1, 3 * size).astype(jnp.float32)
    b_hh_2d = b_hh.reshape(1, 3 * size).astype(jnp.float32)

    # ---- Phase 1: batched input projection over all T*N rows ----------------
    M = T * N
    x2d = x.reshape(M, insize).astype(compute_dtype)

    tm = min(int(tile_m), _round_up(M, 8))
    tm = _round_up(max(tm, 8), 8)
    padded_M = _round_up(M, tm)                # cdiv grid via zero padding
    if padded_M != M:
        x2d = jnp.pad(x2d, ((0, padded_M - M), (0, 0)))

    proj_bytes = (padded_M * insize * x2d.dtype.itemsize
                  + w_ih_t.size * w_ih_t.dtype.itemsize
                  + b_ih_2d.size * 4
                  + padded_M * 3 * size * 4)

    gx2d = pl.pallas_call(
        _input_proj_kernel,
        out_shape=jax.ShapeDtypeStruct((padded_M, 3 * size), jnp.float32),
        grid_spec=pltpu.PrefetchScalarGridSpec(
            num_scalar_prefetch=0,
            grid=(padded_M // tm,),
            in_specs=[
                pl.BlockSpec((tm, insize), lambda i: (i, 0)),        # x tile
                pl.BlockSpec((insize, 3 * size), lambda i: (0, 0)),  # W_ih^T
                pl.BlockSpec((1, 3 * size), lambda i: (0, 0)),       # b_ih
            ],
            out_specs=pl.BlockSpec((tm, 3 * size), lambda i: (i, 0)),
        ),
        compiler_params=pltpu.CompilerParams(
            dimension_semantics=("parallel",),
            vmem_limit_bytes=_vmem_limit_bytes(tm, insize, size, compute_dtype),
        ),
        cost_estimate=pl.CostEstimate(
            flops=2 * padded_M * insize * 3 * size,
            transcendentals=0,
            bytes_accessed=int(proj_bytes),
        ),
    )(x2d, w_ih_t, b_ih_2d)

    gx = gx2d[:M].reshape(T, N, 3 * size)

    # ---- Phase 2: sequential recurrence over time ----------------------------
    rec_bytes = (gx.size * 4 + w_hh_t.size * w_hh_t.dtype.itemsize
                 + b_hh_2d.size * 4 + T * N * size * 4)

    y = pl.pallas_call(
        _gru_recurrence_kernel,
        out_shape=jax.ShapeDtypeStruct((T, N, size), jnp.float32),
        grid_spec=pltpu.PrefetchScalarGridSpec(
            num_scalar_prefetch=0,
            grid=(T,),
            in_specs=[
                pl.BlockSpec((1, N, 3 * size), lambda t: (t, 0, 0)),  # gx_t
                pl.BlockSpec((size, 3 * size), lambda t: (0, 0)),     # W_hh^T
                pl.BlockSpec((1, 3 * size), lambda t: (0, 0)),        # b_hh
            ],
            out_specs=pl.BlockSpec((1, N, size), lambda t: (t, 0, 0)),
            scratch_shapes=[pltpu.VMEM((N, size), jnp.float32)],      # h state
        ),
        compiler_params=pltpu.CompilerParams(
            dimension_semantics=("arbitrary",),   # state carried across steps
        ),
        cost_estimate=pl.CostEstimate(
            flops=2 * T * N * size * 3 * size + 10 * T * N * size,
            transcendentals=3 * T * N * size,
            bytes_accessed=int(rec_bytes),
        ),
    )(gx, w_hh_t, b_hh_2d)

    return y


def reference_forward(x, w_ih, w_hh, b_ih, b_hh):
    """Pure-JAX reference mirroring torch.nn.GRU (single layer, h0 = 0)."""
    size = w_hh.shape[1]
    N = x.shape[1]
    hp = jax.lax.Precision.HIGHEST

    def step(h, x_t):
        gx = jnp.dot(x_t, w_ih.T, precision=hp) + b_ih
        gh = jnp.dot(h, w_hh.T, precision=hp) + b_hh
        r = jax.nn.sigmoid(gx[:, :size] + gh[:, :size])
        z = jax.nn.sigmoid(gx[:, size:2 * size] + gh[:, size:2 * size])
        n = jnp.tanh(gx[:, 2 * size:] + r * gh[:, 2 * size:])
        h_new = (1.0 - z) * n + z * h
        return h_new, h_new

    h0 = jnp.zeros((N, size), jnp.float32)
    _, ys = jax.lax.scan(step, h0, x)
    return ys


if __name__ == "__main__":
    # Small shapes: T=8 (seq), N=2 (batch), insize=32, size=32
    T, N, insize, size = 8, 2, 32, 32

    key = jax.random.PRNGKey(0)
    kx, k1, k2, k3, k4 = jax.random.split(key, 5)

    x = jax.random.normal(kx, (T, N, insize), dtype=jnp.float32)
    # Deterministic synthetic parameters (PyTorch nn.GRU layout, gate order r,z,n).
    # NOTE: the module's quantized-orthonormal reset_parameters / json export are
    # host-side parameter prep, not part of the forward pass.
    w_ih = jax.random.normal(k1, (3 * size, insize), dtype=jnp.float32) * 0.1
    w_hh = jax.random.normal(k2, (3 * size, size), dtype=jnp.float32) * 0.1
    b_ih = jax.random.normal(k3, (3 * size,), dtype=jnp.float32) * 0.1
    b_hh = jax.random.normal(k4, (3 * size,), dtype=jnp.float32) * 0.1

    y = cudnn_gru_forward(x, w_ih, w_hh, b_ih, b_hh)
    y = jax.block_until_ready(y)

    ref = reference_forward(x, w_ih, w_hh, b_ih, b_hh)
    assert y.shape == (T, N, size)
    assert jnp.allclose(y, ref, atol=1e-4, rtol=1e-4), "mismatch vs reference"

    print("KERNEL_OK")
</pallas_src>

<mosaic_0001>
module attributes {stable_mosaic.version = 11 : i64} {
  func.func @_input_proj_kernel(%arg0: i32, %arg1: memref<16x32xf32, #tpu.memory_space<vmem>>, %arg2: memref<32x96xf32, #tpu.memory_space<vmem>>, %arg3: memref<1x96xf32, #tpu.memory_space<vmem>>, %arg4: memref<16x96xf32, #tpu.memory_space<vmem>>) attributes {dimension_semantics = [#tpu.dimension_semantics<parallel>], iteration_bounds = array<i64: 1>, scalar_prefetch = 0 : i64, scratch_operands = 0 : i64, tpu.core_type = #tpu.core_type<tc>, window_params = [{transform_indices = @transform_0, window_bounds = array<i64: 16, 32>}, {pipeline_mode = #tpu.pipeline_mode<synchronous>, transform_indices = @transform_1, window_bounds = array<i64: 32, 96>}, {pipeline_mode = #tpu.pipeline_mode<synchronous>, transform_indices = @transform_2, window_bounds = array<i64: 1, 96>}, {transform_indices = @transform_3, window_bounds = array<i64: 16, 96>}]} {
    %c0 = arith.constant 0 : index
    %c0_0 = arith.constant 0 : index
    %0 = vector.load %arg1[%c0, %c0_0] : memref<16x32xf32, #tpu.memory_space<vmem>>, vector<16x32xf32>
    %c0_1 = arith.constant 0 : index
    %c0_2 = arith.constant 0 : index
    %1 = vector.load %arg2[%c0_1, %c0_2] : memref<32x96xf32, #tpu.memory_space<vmem>>, vector<32x96xf32>
    %cst = arith.constant dense<0.000000e+00> : vector<16x96xf32>
    %2 = tpu.matmul %0, %1, %cst {dimension_numbers = #tpu.dot_dimension_numbers<[1], [0], [0], [1], [0, 0, 1, 1], [], []>} : vector<16x32xf32>, vector<32x96xf32>, vector<16x96xf32> -> vector<16x96xf32>
    %c0_3 = arith.constant 0 : index
    %c0_4 = arith.constant 0 : index
    %3 = vector.load %arg3[%c0_3, %c0_4] : memref<1x96xf32, #tpu.memory_space<vmem>>, vector<1x96xf32>
    %4 = vector.broadcast %3 : vector<1x96xf32> to vector<16x96xf32>
    %5 = arith.addf %2, %4 : vector<16x96xf32>
    %c0_5 = arith.constant 0 : index
    %c0_6 = arith.constant 0 : index
    %6 = vector.load %arg4[%c0_5, %c0_6] : memref<16x96xf32, #tpu.memory_space<vmem>>, vector<16x96xf32>
    tpu.vector_store %arg4[%c0_5, %c0_6], %5 {strides = array<i32>} : memref<16x96xf32, #tpu.memory_space<vmem>>, vector<16x96xf32>,
    return
  }
  func.func @transform_0(%arg0: i32) -> (i32, i32) {
    %c0_i32 = arith.constant 0 : i32
    %c0_i32_0 = arith.constant 0 : i32
    return %arg0, %c0_i32 : i32, i32
  }
  func.func @transform_1(%arg0: i32) -> (i32, i32) {
    %c0_i32 = arith.constant 0 : i32
    %c0_i32_0 = arith.constant 0 : i32
    %c0_i32_1 = arith.constant 0 : i32
    return %c0_i32, %c0_i32_0 : i32, i32
  }
  func.func @transform_2(%arg0: i32) -> (i32, i32) {
    %c0_i32 = arith.constant 0 : i32
    %c0_i32_0 = arith.constant 0 : i32
    %c0_i32_1 = arith.constant 0 : i32
    return %c0_i32, %c0_i32_0 : i32, i32
  }
  func.func @transform_3(%arg0: i32) -> (i32, i32) {
    %c0_i32 = arith.constant 0 : i32
    %c0_i32_0 = arith.constant 0 : i32
    return %arg0, %c0_i32 : i32, i32
  }
}

</mosaic_0001>

<llo_original>
// kernel: tpu_custom_call.1
$region0: #{tpu_custom_call.1}
  #allocation0 [shape = 'u32[]', space=smem, size = 0x4, offset = 0x4, fixed_abs, tag = 'smem constant byte address 0x4 - core index']
  #allocation1 [shape = 'u32[144,128]{1,0:T(1,128)}', space=vmem, size = 0x12000, scoped, tag = 'internal scratch']
  %s0 = inlined_call_operand.hbm [shape: f32[16,32], index: 0, kind: input, shape index: {}]
  %s1 = inlined_call_operand.hbm [shape: f32[32,96], index: 1, kind: input, shape index: {}]
  %s2 = inlined_call_operand.vmem [shape: f32[1,96], index: 2, kind: input, shape index: {}]
  %s3 = inlined_call_operand.hbm [shape: f32[16,96], index: 3, kind: output, shape index: {}]
  %s4 = sld [smem:[#allocation0]]
  $region30: #{tpu_custom_call.1} parent=0
    _
  %s6 = ssub.s32 1, %s4
  %s7 = scalar_select 0, %s6, %s4
  $region1: #{tpu_custom_call.1} parent=0
    #allocation2 [shape = 'u8[8192]{0}', space=vmem, size = 0x2000, scoped, tag = 'input window, operand 0, single buffered']
    #allocation3 [shape = 's32[1]{0}', space=sflag, size = 0x4, scoped, tag = 'scoped memory for tpu_custom_call.1']
    #allocation4 [shape = 's32[1]{0}', space=sflag, size = 0x4, scoped, tag = 'scoped memory for tpu_custom_call.1']
    #allocation5 [shape = 'u8[16384]{0}', space=vmem, size = 0x4000, scoped, tag = 'input window, operand 1, single buffered']
    #allocation6 [shape = 's32[1]{0}', space=sflag, size = 0x4, scoped, tag = 'scoped memory for tpu_custom_call.1']
    #allocation7 [shape = 'u8[8192]{0}', space=vmem, size = 0x2000, scoped, tag = 'output window, operand 0, single buffered']
    %8 = vsyncpa [#allocation3], 0
    %9 = vsyncpa [#allocation6], 0
    %10 = vsyncpa [#allocation4], 0
    // Predicated region
    $region2: #{tpu_custom_call.1} parent=1 // pred_check
      _
    $region3: #{tpu_custom_call.1} parent=1 // pred_check_branch
      %12 = sbr.rel (0) target = $region5
    $region4: #{tpu_custom_call.1} parent=1 // pred_region
      %s14 = ssub.s32 256, 256
      %15 = vsyncadd [#allocation3], %s14
      %s16 = sshll.u32 [#allocation2], 4
      %s17 = int_to_ptr.vmem [resolvable:$true] %s16
      %22 = dma.hbm_to_vmem [thread:$0]  %s0, 256, %s17, [#allocation3], 128, 128, 8
    $region5: #{tpu_custom_call.1} parent=1 // pred_fallthru
      _
    // Predicated region
    $region6: #{tpu_custom_call.1} parent=1 // pred_check
      _
    $region7: #{tpu_custom_call.1} parent=1 // pred_check_branch
      %24 = sbr.rel (0) target = $region9
    $region8: #{tpu_custom_call.1} parent=1 // pred_region
      %s26 = ssub.s32 512, 512
      %27 = vsyncadd [#allocation6], %s26
      %s28 = sshll.u32 [#allocation5], 4
      %s29 = int_to_ptr.vmem [resolvable:$true] %s28
      %34 = dma.hbm_to_vmem [thread:$0]  %s1, 512, %s29, [#allocation6], 128, 128, 8
    $region9: #{tpu_custom_call.1} parent=1 // pred_fallthru
      _
    // Predicated region
    $region10: #{tpu_custom_call.1} parent=1 // pred_check
      _
    $region11: #{tpu_custom_call.1} parent=1 // pred_check_branch
      %36 = sbr.rel (0) target = $region13
    $region12: #{tpu_custom_call.1} parent=1 // pred_region
      _
    $region13: #{tpu_custom_call.1} parent=1 // pred_fallthru
      _
    // Predicated region
    $region14: #{tpu_custom_call.1} parent=1 // pred_check
      _
    $region15: #{tpu_custom_call.1} parent=1 // pred_check_branch
      %38 = sbr.rel (0) target = $region17
    $region16: #{tpu_custom_call.1} parent=1 // pred_region
      %39 = dma.done [#allocation3], 256
    $region17: #{tpu_custom_call.1} parent=1 // pred_fallthru
      _
    // Predicated region
    $region18: #{tpu_custom_call.1} parent=1 // pred_check
      _
    $region19: #{tpu_custom_call.1} parent=1 // pred_check_branch
      %41 = sbr.rel (0) target = $region21
    $region20: #{tpu_custom_call.1} parent=1 // pred_region
      %42 = dma.done [#allocation6], 512
    $region21: #{tpu_custom_call.1} parent=1 // pred_fallthru
      _
    %v43 = vld [vmem:[#allocation2] sm:$0xff]
    %v44 = vld [vmem:[#allocation2 + $0x8] sm:$0xff]
    %v45 = vld [vmem:[#allocation5] sm:$0xff]
    %v46 = vld [vmem:[#allocation5 + $0x8] sm:$0xff]
    %v47 = vld [vmem:[#allocation5 + $0x10] sm:$0xff]
    %v48 = vld [vmem:[#allocation5 + $0x18] sm:$0xff]
    %v49 = vld [vmem:[%s2] sm:$0x1]
    %v51 = vlaneseq
    %v52 = vshrl.u32 %v51, 7
    %v53 = vsub.s32 0, %v52
    %v54 = vrot.slane %v49, %v53
    %vm56 = vcmask 261120
    %v58 = vsel %vm56, %v43, 0
    %v61 = vsel %vm56, %v44, 0
    %63 = vmatprep.subr.mxu0 0.0
    %64 = vmatpush1.msra.mxu0 %v45
    %65 = vmatprep.subr.mxu0 0.0
    %66 = vmatpush1.msra.mxu0 %v46
    %67 = vmatprep.subr.mxu0 0.0
    %68 = vmatpush1.msra.mxu0 %v47
    %69 = vmatprep.subr.mxu0 0.0
    %70 = vmatpush1.msra.mxu0 %v48
    %71 = vmatprep.subr.mxu0 0.0
    %72 = vmatpush1.msra.mxu0 0.0
    %73 = vmatprep.subr.mxu0 0.0
    %74 = vmatpush1.msra.mxu0 0.0
    %75 = vmatprep.subr.mxu0 0.0
    %76 = vmatpush1.msra.mxu0 0.0
    %77 = vmatprep.subr.mxu0 0.0
    %78 = vmatpush1.msra.mxu0 0.0
    %79 = vmatprep.subr.mxu0 0.0
    %80 = vmatpush1.msra.mxu0 0.0
    %81 = vmatprep.subr.mxu0 0.0
    %82 = vmatpush1.msra.mxu0 0.0
    %83 = vmatprep.subr.mxu0 0.0
    %84 = vmatpush1.msra.mxu0 0.0
    %85 = vmatprep.subr.mxu0 0.0
    %86 = vmatpush1.msra.mxu0 0.0
    %87 = vmatprep.subr.mxu0 0.0
    %88 = vmatpush1.msra.mxu0 0.0
    %89 = vmatprep.subr.mxu0 0.0
    %90 = vmatpush1.msra.mxu0 0.0
    %91 = vmatprep.subr.mxu0 0.0
    %92 = vmatpush1.msra.mxu0 0.0
    %93 = vmatprep.subr.mxu0 0.0
    %94 = vmatpush1.msra.mxu0 0.0
    %95 = vmatprep.subr.mxu0 0.0
    %96 = vmatpush1.msra.mxu0 0.0
    %97 = vmatprep.subr.mxu0 0.0
    %98 = vmatpush1.msra.mxu0 0.0
    %99 = vmatprep.subr.mxu0 0.0
    %100 = vmatpush1.msra.mxu0 0.0
    %101 = vmatprep.subr.mxu0 0.0
    %102 = vmatpush1.msra.mxu0 0.0
    %103 = vmatprep.subr.mxu0 0.0
    %104 = vmatpush1.msra.mxu0 0.0
    %105 = vmatprep.subr.mxu0 0.0
    %106 = vmatpush1.msra.mxu0 0.0
    %107 = vmatprep.subr.mxu0 0.0
    %108 = vmatpush1.msra.mxu0 0.0
    %109 = vmatprep.subr.mxu0 0.0
    %110 = vmatpush1.msra.mxu0 0.0
    %111 = vmatprep.subr.mxu0 0.0
    %112 = vmatpush1.msra.mxu0 0.0
    %113 = vmatprep.subr.mxu0 0.0
    %114 = vmatpush1.msra.mxu0 0.0
    %115 = vmatprep.subr.mxu0 0.0
    %116 = vmatpush1.msra.mxu0 0.0
    %117 = vmatprep.subr.mxu0 0.0
    %118 = vmatpush1.msra.mxu0 0.0
    %119 = vmatprep.subr.mxu0 0.0
    %120 = vmatpush1.msra.mxu0 0.0
    %121 = vmatprep.subr.mxu0 0.0
    %122 = vmatpush1.msra.mxu0 0.0
    %123 = vmatprep.subr.mxu0 0.0
    %124 = vmatpush1.msra.mxu0 0.0
    %125 = vmatprep.subr.mxu0 0.0
    %126 = vmatpush1.msra.mxu0 0.0
    %127 = vmatprep.mubr.f32.mxu0 0.0
    %128 = vmatmul.mubr.f32.gmra.mrb[0].mxu0 %v58
    %v129 = vpop.f32.mrb[0].mxu0
    %v130 = vadd.f32 %v54, %v129
    %v131 = vpop.f32.mrb[0].mxu0
    %132 = vmatprep.mubr.f32.mxu0 0.0
    %133 = vmatmul.mubr.f32.gmra.mrb[0].mxu0 %v61
    %v134 = vpop.f32.mrb[0].mxu0
    %v135 = vadd.f32 %v54, %v134
    %v136 = vpop.f32.mrb[0].mxu0
    %137 = vdwg.mxu0
    %vm138 = vcmask 785408
    %139 = vst.msk [vmem:[#allocation7] sm:$0xff] %vm138, %v130
    %140 = vst.msk [vmem:[#allocation7 + $0x8] sm:$0xff] %vm138, %v135
    // Predicated region
    $region22: #{tpu_custom_call.1} parent=1 // pred_check
      _
    $region23: #{tpu_custom_call.1} parent=1 // pred_check_branch
      %142 = sbr.rel (0) target = $region25
    $region24: #{tpu_custom_call.1} parent=1 // pred_region
      %s144 = ssub.s32 256, 256
      %145 = vsyncadd [#allocation4], %s144
      %s146 = sshll.u32 [#allocation7], 4
      %s147 = int_to_ptr.vmem [resolvable:$true] %s146
      %152 = dma.vmem_to_hbm [thread:$0]  %s147, 256, %s3, [#allocation4], 128, 128, 8
    $region25: #{tpu_custom_call.1} parent=1 // pred_fallthru
      _
    // Predicated region
    $region26: #{tpu_custom_call.1} parent=1 // pred_check
      _
    $region27: #{tpu_custom_call.1} parent=1 // pred_check_branch
      %154 = sbr.rel (0) target = $region29
    $region28: #{tpu_custom_call.1} parent=1 // pred_region
      %155 = dma.done [#allocation4], 256
    $region29: #{tpu_custom_call.1} parent=1 // pred_fallthru
      _
    %156 = vsyncpa [#allocation3], 1
    %157 = vsyncpa [#allocation6], 1
    %158 = vsyncpa [#allocation4], 1

</llo_original>
